<compile_context>
chip_gen: v7x
topology: tpu7x:2x2x1
jax: 0.10.0
libtpu: 0.0.40
codegen_flags: <defaults>
</compile_context>

<pallas_src>
import functools

import jax
import jax.numpy as jnp
from jax.experimental import pallas as pl
from jax.experimental.pallas import tpu as pltpu


def _vmem_config():
    """Return (working_budget_bytes, vmem_limit_bytes), gated on chip VMEM."""
    cap = None
    try:
        cap = int(pltpu.get_tpu_info().vmem_capacity_bytes)
    except Exception:
        cap = None
    if cap is None:
        try:
            kind = jax.devices()[0].device_kind.lower()
            cap = (64 * 1024 * 1024 if ("v7" in kind or "7x" in kind)
                   else 128 * 1024 * 1024)
        except Exception:
            cap = 64 * 1024 * 1024          # conservative: fits every generation
    vmem_limit = min(cap * 5 // 8, 100 * 1024 * 1024)  # 40 MiB v7x, 80 MiB v5e/v6e
    budget = vmem_limit // 2                            # 20 MiB v7x, 40 MiB v5e/v6e
    return budget, vmem_limit


def _packed_ce_kernel(info_ref, logits_ref, tgt_ref, out_ref, acc_sc, *,
                      n_rows, tile_n):
    i = pl.program_id(0)
    n_steps = pl.num_programs(0)
    n_active = info_ref[0]                       # number of tiles with >=1 valid token

    @pl.when(i == 0)
    def _():
        acc_sc[...] = jnp.zeros_like(acc_sc)

    @pl.when(i < n_active)                       # inactive (fully padded) tiles skipped
    def _():
        x = logits_ref[...]                      # (tile_n, V) input dtype
        tgt = tgt_ref[...]                       # (tile_n, 1) int32, -1 == padded token

        row0 = info_ref[1 + i] * tile_n          # global row offset of this tile
        row_ids = row0 + jax.lax.broadcasted_iota(jnp.int32, (tile_n, 1), 0)
        mask = (row_ids < n_rows) & (tgt >= 0)   # (tile_n, 1) bool

        # Row max in the input dtype (max of bf16 is exact); only the
        # exp/sum path is widened to f32.
        m = jnp.max(x, axis=-1, keepdims=True)
        xf = x.astype(jnp.float32)
        mf = m.astype(jnp.float32)
        lse = jnp.log(jnp.sum(jnp.exp(xf - mf), axis=-1, keepdims=True))

        # Target logit via one-hot compare (no dynamic gather on TPU); only one
        # element per row is non-zero so the input-dtype sum is exact.
        col_ids = jax.lax.broadcasted_iota(jnp.int32, x.shape, 1)
        tgt_logit = jnp.sum(
            jnp.where(col_ids == tgt, x, jnp.zeros((), x.dtype)),
            axis=-1, keepdims=True).astype(jnp.float32)

        # jnp.where (select), so NaN/inf in masked-out rows contribute 0.
        nll = jnp.where(mask, lse + mf - tgt_logit, 0.0)
        acc_sc[...] = acc_sc[...] + jnp.sum(nll, axis=0, keepdims=True)

    @pl.when(i == n_steps - 1)
    def _():
        out_ref[...] = acc_sc[...]


@functools.partial(jax.jit, static_argnames=("tile_n",))
def packed_cross_entropy_loss(predictions, targets, lengths, tile_n=None):
    """Masked-mean cross-entropy == CrossEntropyLoss over pack_padded_sequence data.

    Note: if sum(lengths) == 0 the result is NaN (division by zero), matching
    PyTorch's behavior for an empty packed sequence.
    """
    B, T, V = predictions.shape
    N = B * T

    logits = predictions.reshape(N, V)           # metadata-only reshape, no cast/pad
    lengths_i = jnp.asarray(lengths).astype(jnp.int32)

    # Mark invalid (padded) tokens with target == -1 (tiny (B, T) int32 op).
    time_ids = jnp.arange(T, dtype=jnp.int32)[None, :]
    valid = time_ids < lengths_i[:, None]                               # (B, T)
    tgt = jnp.where(valid, targets.astype(jnp.int32), -1).reshape(N, 1)

    # Exact denominator from lengths (no in-kernel count).
    denom = jnp.sum(jnp.minimum(lengths_i, T)).astype(jnp.float32)

    # --- Tile sizing (VMEM-budget driven, generation-gated) -----------------
    budget, vmem_limit = _vmem_config()
    itemsize = jnp.dtype(predictions.dtype).itemsize
    pack = max(8, 32 // max(1, itemsize))        # sublane packing: f32 8, bf16 16, i8 32
    if tile_n is None:
        # double-buffered input block + ~20 B/elem of f32/int32 temporaries
        per_row = V * (2 * itemsize + 20) + 64
        tile_n = (budget // per_row) // pack * pack
        tile_n = max(pack, min(1024, int(tile_n)))
    tile_n = int(min(tile_n, max(pack, ((N + pack - 1) // pack) * pack)))

    n_tiles = (N + tile_n - 1) // tile_n

    # --- Compacted active-tile table (skip fully padded tiles) --------------
    pad = n_tiles * tile_n - N
    valid_flat = jnp.pad(valid.reshape(N), (0, pad))
    tile_active = jnp.any(valid_flat.reshape(n_tiles, tile_n), axis=1)
    tile_ids = jnp.arange(n_tiles, dtype=jnp.int32)
    n_active = jnp.sum(tile_active.astype(jnp.int32))
    # Active tile ids first (in order), inactive slots pushed to the end ...
    compact = jnp.sort(jnp.where(tile_active, tile_ids, jnp.int32(n_tiles)))
    # ... and inactive grid steps repeat the last active id so the pipeline
    # sees an unchanged block index and skips the DMA.
    last_active = jnp.where(n_active > 0,
                            compact[jnp.maximum(n_active - 1, 0)], jnp.int32(0))
    table = jnp.where(tile_ids < n_active, compact, last_active)
    table = jnp.minimum(table, jnp.int32(n_tiles - 1))
    info = jnp.concatenate([n_active[None], table]).astype(jnp.int32)

    kernel = functools.partial(_packed_ce_kernel, n_rows=N, tile_n=tile_n)

    total = pl.pallas_call(
        kernel,
        out_shape=jax.ShapeDtypeStruct((1, 1), jnp.float32),
        grid_spec=pltpu.PrefetchScalarGridSpec(
            num_scalar_prefetch=1,
            grid=(n_tiles,),
            in_specs=[
                pl.BlockSpec((tile_n, V), lambda i, info: (info[1 + i], 0)),
                pl.BlockSpec((tile_n, 1), lambda i, info: (info[1 + i], 0)),
            ],
            out_specs=pl.BlockSpec((1, 1), lambda i, info: (0, 0)),
            scratch_shapes=[pltpu.VMEM((1, 1), jnp.float32)],  # running NLL sum
        ),
        compiler_params=pltpu.CompilerParams(
            dimension_semantics=("arbitrary",),
            vmem_limit_bytes=int(vmem_limit),
        ),
    )(info, logits, tgt)

    return total[0, 0] / denom


if __name__ == "__main__":
    key = jax.random.PRNGKey(0)
    B, T, V = 2, 8, 32
    k1, k2 = jax.random.split(key)
    predictions = jax.random.normal(k1, (B, T, V), dtype=jnp.float32)
    targets = jax.random.randint(k2, (B, T), 0, V, dtype=jnp.int32)
    # pack_padded_sequence (enforce_sorted=True) expects descending lengths.
    lengths = jnp.array([8, 5], dtype=jnp.int32)

    loss = packed_cross_entropy_loss(predictions, targets, lengths)
    loss = jax.block_until_ready(loss)

    # Pure-JAX reference: masked mean NLL over valid tokens.
    logp = jax.nn.log_softmax(predictions, axis=-1)
    valid = (jnp.arange(T)[None, :] < lengths[:, None]).astype(jnp.float32)
    nll = -jnp.take_along_axis(logp, targets[..., None], axis=-1)[..., 0]
    ref = jnp.sum(nll * valid) / jnp.sum(valid)
    assert jnp.allclose(loss, ref, atol=1e-5), (float(loss), float(ref))

    print("KERNEL_OK")
</pallas_src>

<mosaic_0001>
module attributes {stable_mosaic.version = 11 : i64} {
  func.func @_packed_ce_kernel(%arg0: i32, %arg1: memref<2xi32, #tpu.memory_space<smem>>, %arg2: memref<16x32xf32, #tpu.memory_space<vmem>>, %arg3: memref<16x1xi32, #tpu.memory_space<vmem>>, %arg4: memref<1x1xf32, #tpu.memory_space<vmem>>, %arg5: memref<1x1xf32, #tpu.memory_space<vmem>>) attributes {dimension_semantics = [#tpu.dimension_semantics<arbitrary>], iteration_bounds = array<i64: 1>, scalar_prefetch = 1 : i64, scratch_operands = 1 : i64, tpu.core_type = #tpu.core_type<tc>, window_params = [{transform_indices = @transform_0, window_bounds = array<i64: 16, 32>}, {transform_indices = @transform_1, window_bounds = array<i64: 16, 1>}, {pipeline_mode = #tpu.pipeline_mode<synchronous>, transform_indices = @transform_2, window_bounds = array<i64: 1, 1>}]} {
    %c0 = arith.constant 0 : index
    %0 = memref.load %arg1[%c0] : memref<2xi32, #tpu.memory_space<smem>>
    %c0_i32 = arith.constant 0 : i32
    %1 = arith.cmpi eq, %arg0, %c0_i32 : i32
    %2 = arith.extui %1 : i1 to i32
    %c0_i32_0 = arith.constant 0 : i32
    %3 = arith.cmpi ne, %2, %c0_i32_0 : i32
    scf.if %3 {
      %cst = arith.constant 0.000000e+00 : f32
      %10 = vector.broadcast %cst : f32 to vector<1x1xf32>
      %c0_4 = arith.constant 0 : index
      %c0_5 = arith.constant 0 : index
      %11 = vector.load %arg5[%c0_4, %c0_5] : memref<1x1xf32, #tpu.memory_space<vmem>>, vector<1x1xf32>
      tpu.vector_store %arg5[%c0_4, %c0_5], %10 {strides = array<i32>} : memref<1x1xf32, #tpu.memory_space<vmem>>, vector<1x1xf32>,
    } else {
    }
    %4 = arith.cmpi slt, %arg0, %0 : i32
    %5 = arith.extui %4 : i1 to i32
    %c0_i32_1 = arith.constant 0 : i32
    %6 = arith.cmpi ne, %5, %c0_i32_1 : i32
    scf.if %6 {
      %c0_4 = arith.constant 0 : index
      %c0_5 = arith.constant 0 : index
      %10 = vector.load %arg2[%c0_4, %c0_5] : memref<16x32xf32, #tpu.memory_space<vmem>>, vector<16x32xf32>
      %c0_6 = arith.constant 0 : index
      %c0_7 = arith.constant 0 : index
      %11 = vector.load %arg3[%c0_6, %c0_7] : memref<16x1xi32, #tpu.memory_space<vmem>>, vector<16x1xi32>
      %c1_i32 = arith.constant 1 : i32
      %12 = arith.addi %c1_i32, %arg0 : i32
      %13 = arith.index_cast %12 : i32 to index
      %14 = memref.load %arg1[%13] : memref<2xi32, #tpu.memory_space<smem>>
      %c16_i32 = arith.constant 16 : i32
      %15 = arith.muli %14, %c16_i32 : i32
      %16 = tpu.iota {dimensions = array<i32: 0>} : vector<16x1xi32>
      %17 = vector.broadcast %15 : i32 to vector<16x1xi32>
      %18 = arith.addi %17, %16 : vector<16x1xi32>
      %c16_i32_8 = arith.constant 16 : i32
      %19 = vector.broadcast %c16_i32_8 : i32 to vector<16x1xi32>
      %20 = arith.cmpi slt, %18, %19 : vector<16x1xi32>
      %c0_i32_9 = arith.constant 0 : i32
      %21 = vector.broadcast %c0_i32_9 : i32 to vector<16x1xi32>
      %22 = arith.cmpi sge, %11, %21 : vector<16x1xi32>
      %23 = arith.andi %20, %22 : vector<16x1xi1>
      %cst = arith.constant dense<0xFF800000> : vector<16xf32>
      %24 = vector.multi_reduction <maximumf>, %10, %cst [1] : vector<16x32xf32> to vector<16xf32>
      %25 = vector.shape_cast %24 : vector<16xf32> to vector<16x1xf32>
      %26 = vector.broadcast %25 : vector<16x1xf32> to vector<16x32xf32>
      %27 = arith.subf %10, %26 : vector<16x32xf32>
      %28 = math.exp %27 : vector<16x32xf32>
      %cst_10 = arith.constant dense<0.000000e+00> : vector<16xf32>
      %29 = vector.multi_reduction <add>, %28, %cst_10 [1] : vector<16x32xf32> to vector<16xf32>
      %30 = vector.shape_cast %29 : vector<16xf32> to vector<16x1xf32>
      %31 = math.log %30 : vector<16x1xf32>
      %32 = tpu.iota {dimensions = array<i32: 1>} : vector<16x32xi32>
      %33 = vector.broadcast %11 : vector<16x1xi32> to vector<16x32xi32>
      %34 = arith.cmpi eq, %32, %33 : vector<16x32xi32>
      %cst_11 = arith.constant 0.000000e+00 : f32
      %35 = vector.broadcast %cst_11 : f32 to vector<16x32xf32>
      %36 = arith.select %34, %10, %35 : vector<16x32xi1>, vector<16x32xf32>
      %cst_12 = arith.constant dense<0.000000e+00> : vector<16xf32>
      %37 = vector.multi_reduction <add>, %36, %cst_12 [1] : vector<16x32xf32> to vector<16xf32>
      %38 = vector.shape_cast %37 : vector<16xf32> to vector<16x1xf32>
      %39 = arith.addf %31, %25 : vector<16x1xf32>
      %40 = arith.subf %39, %38 : vector<16x1xf32>
      %cst_13 = arith.constant 0.000000e+00 : f32
      %41 = vector.broadcast %cst_13 : f32 to vector<16x1xf32>
      %42 = arith.select %23, %40, %41 : vector<16x1xi1>, vector<16x1xf32>
      %c0_14 = arith.constant 0 : index
      %c0_15 = arith.constant 0 : index
      %43 = vector.load %arg5[%c0_14, %c0_15] : memref<1x1xf32, #tpu.memory_space<vmem>>, vector<1x1xf32>
      %cst_16 = arith.constant dense<0.000000e+00> : vector<1xf32>
      %44 = vector.multi_reduction <add>, %42, %cst_16 [0] : vector<16x1xf32> to vector<1xf32>
      %45 = vector.shape_cast %44 : vector<1xf32> to vector<1x1xf32>
      %46 = arith.addf %43, %45 : vector<1x1xf32>
      %c0_17 = arith.constant 0 : index
      %c0_18 = arith.constant 0 : index
      %47 = vector.load %arg5[%c0_17, %c0_18] : memref<1x1xf32, #tpu.memory_space<vmem>>, vector<1x1xf32>
      tpu.vector_store %arg5[%c0_17, %c0_18], %46 {strides = array<i32>} : memref<1x1xf32, #tpu.memory_space<vmem>>, vector<1x1xf32>,
    } else {
    }
    %c0_i32_2 = arith.constant 0 : i32
    %7 = arith.cmpi eq, %arg0, %c0_i32_2 : i32
    %8 = arith.extui %7 : i1 to i32
    %c0_i32_3 = arith.constant 0 : i32
    %9 = arith.cmpi ne, %8, %c0_i32_3 : i32
    scf.if %9 {
      %c0_4 = arith.constant 0 : index
      %c0_5 = arith.constant 0 : index
      %10 = vector.load %arg5[%c0_4, %c0_5] : memref<1x1xf32, #tpu.memory_space<vmem>>, vector<1x1xf32>
      %c0_6 = arith.constant 0 : index
      %c0_7 = arith.constant 0 : index
      %11 = vector.load %arg4[%c0_6, %c0_7] : memref<1x1xf32, #tpu.memory_space<vmem>>, vector<1x1xf32>
      tpu.vector_store %arg4[%c0_6, %c0_7], %10 {strides = array<i32>} : memref<1x1xf32, #tpu.memory_space<vmem>>, vector<1x1xf32>,
    } else {
    }
    return
  }
  func.func @transform_0(%arg0: i32, %arg1: memref<2xi32, #tpu.memory_space<smem>>) -> (i32, i32) {
    %c1_i32 = arith.constant 1 : i32
    %0 = arith.addi %c1_i32, %arg0 : i32
    %1 = arith.index_cast %0 : i32 to index
    %2 = memref.load %arg1[%1] : memref<2xi32, #tpu.memory_space<smem>>
    %c0_i32 = arith.constant 0 : i32
    %c0_i32_0 = arith.constant 0 : i32
    return %2, %c0_i32 : i32, i32
  }
  func.func @transform_1(%arg0: i32, %arg1: memref<2xi32, #tpu.memory_space<smem>>) -> (i32, i32) {
    %c1_i32 = arith.constant 1 : i32
    %0 = arith.addi %c1_i32, %arg0 : i32
    %1 = arith.index_cast %0 : i32 to index
    %2 = memref.load %arg1[%1] : memref<2xi32, #tpu.memory_space<smem>>
    %c0_i32 = arith.constant 0 : i32
    %c0_i32_0 = arith.constant 0 : i32
    return %2, %c0_i32 : i32, i32
  }
  func.func @transform_2(%arg0: i32, %arg1: memref<2xi32, #tpu.memory_space<smem>>) -> (i32, i32) {
    %c0_i32 = arith.constant 0 : i32
    %c0_i32_0 = arith.constant 0 : i32
    %c0_i32_1 = arith.constant 0 : i32
    return %c0_i32, %c0_i32_0 : i32, i32
  }
}

</mosaic_0001>

<llo_original>
// kernel: packed_cross_entropy_loss.1
$region0: #{packed_cross_entropy_loss.1}
  #allocation0 [shape = 'u32[]', space=smem, size = 0x4, offset = 0x4, fixed_abs, tag = 'smem constant byte address 0x4 - core index']
  #allocation1 [shape = 'u32[144,128]{1,0:T(1,128)}', space=vmem, size = 0x12000, scoped, tag = 'internal scratch']
  #allocation2 [shape = 'f32[1,1]{1,0:T(1,128)}', space=vmem, size = 0x200, scoped, tag = 'scratch operand']
  #allocation3 [shape = 's32[1]{0}', space=sflag, size = 0x4, scoped, tag = 'scoped memory for packed_cross_entropy_loss.1']
  #allocation4 [shape = 'u8[512]{0}', space=smem, size = 0x200, scoped, tag = 'prefetched SMEM operand 0']
  %s0 = inlined_call_operand.hbm [shape: s32[2], index: 0, kind: input, shape index: {}]
  %s1 = inlined_call_operand.hbm [shape: f32[16,32], index: 1, kind: input, shape index: {}]
  %s2 = inlined_call_operand.hbm [shape: s32[16,1], index: 2, kind: input, shape index: {}]
  %s3 = inlined_call_operand.hbm [shape: f32[1,1], index: 3, kind: output, shape index: {}]
  %s4 = sld [smem:[#allocation0]]
  $region38: #{packed_cross_entropy_loss.1} parent=0
    _
  %s6 = ssub.s32 1, %s4
  %s7 = scalar_select 0, %s6, %s4
  %9 = dma.hbm_to_smem %s0, 16, [#allocation4], [#allocation3]
  %10 = dma.done [#allocation3], 16
  %11 = sfence
  $region1: #{packed_cross_entropy_loss.1} parent=0
    #allocation5 [shape = 'u8[8192]{0}', space=vmem, size = 0x2000, scoped, tag = 'input window, operand 1, single buffered']
    #allocation6 [shape = 's32[1]{0}', space=sflag, size = 0x4, scoped, tag = 'scoped memory for packed_cross_entropy_loss.1']
    #allocation7 [shape = 's32[1]{0}', space=sflag, size = 0x4, scoped, tag = 'scoped memory for packed_cross_entropy_loss.1']
    #allocation8 [shape = 'u8[8192]{0}', space=vmem, size = 0x2000, scoped, tag = 'input window, operand 2, single buffered']
    #allocation9 [shape = 's32[1]{0}', space=sflag, size = 0x4, scoped, tag = 'scoped memory for packed_cross_entropy_loss.1']
    #allocation10 [shape = 'u8[512]{0}', space=vmem, size = 0x400, scoped, tag = 'output window, operand 0, single buffered']
    %12 = vsyncpa [#allocation6], 0
    %13 = vsyncpa [#allocation9], 0
    %14 = vsyncpa [#allocation7], 0
    // Predicated region
    $region2: #{packed_cross_entropy_loss.1} parent=1 // pred_check
      _
    $region3: #{packed_cross_entropy_loss.1} parent=1 // pred_check_branch
      %16 = sbr.rel (0) target = $region5
    $region4: #{packed_cross_entropy_loss.1} parent=1 // pred_region
      %s17 = sadd.s32 0, 1
      %s18 = sld [smem:[#allocation4 + %s17]]
      %s19 = smul.u32 2, %s18
      %s21 = ssub.s32 256, 256
      %22 = vsyncadd [#allocation6], %s21
      %s23 = smul.addr %s19, 128
      %s24 = scalar_lea.hbm %s1, %s23
      %s25 = sshll.u32 [#allocation5], 4
      %s26 = int_to_ptr.vmem [resolvable:$true] %s25
      %31 = dma.hbm_to_vmem [thread:$0]  %s24, 256, %s26, [#allocation6], 128, 128, 8
    $region5: #{packed_cross_entropy_loss.1} parent=1 // pred_fallthru
      _
    // Predicated region
    $region6: #{packed_cross_entropy_loss.1} parent=1 // pred_check
      _
    $region7: #{packed_cross_entropy_loss.1} parent=1 // pred_check_branch
      %33 = sbr.rel (0) target = $region9
    $region8: #{packed_cross_entropy_loss.1} parent=1 // pred_region
      %s34 = sadd.s32 0, 1
      %s35 = sld [smem:[#allocation4 + %s34]]
      %s36 = smul.u32 2, %s35
      %s38 = ssub.s32 256, 256
      %39 = vsyncadd [#allocation9], %s38
      %s40 = smul.addr %s36, 128
      %s41 = scalar_lea.hbm %s2, %s40
      %s42 = sshll.u32 [#allocation8], 4
      %s43 = int_to_ptr.vmem [resolvable:$true] %s42
      %48 = dma.hbm_to_vmem [thread:$0]  %s41, 256, %s43, [#allocation9], 128, 128, 8
    $region9: #{packed_cross_entropy_loss.1} parent=1 // pred_fallthru
      _
    // Predicated region
    $region10: #{packed_cross_entropy_loss.1} parent=1 // pred_check
      _
    $region11: #{packed_cross_entropy_loss.1} parent=1 // pred_check_branch
      %50 = sbr.rel (0) target = $region13
    $region12: #{packed_cross_entropy_loss.1} parent=1 // pred_region
      %51 = dma.done [#allocation6], 256
    $region13: #{packed_cross_entropy_loss.1} parent=1 // pred_fallthru
      _
    // Predicated region
    $region14: #{packed_cross_entropy_loss.1} parent=1 // pred_check
      _
    $region15: #{packed_cross_entropy_loss.1} parent=1 // pred_check_branch
      %53 = sbr.rel (0) target = $region17
    $region16: #{packed_cross_entropy_loss.1} parent=1 // pred_region
      %54 = dma.done [#allocation9], 256
    $region17: #{packed_cross_entropy_loss.1} parent=1 // pred_fallthru
      _
    %s55 = sadd.s32 0, 1
    %s56 = sld [smem:[#allocation4 + %s55]]
    %s57 = smul.u32 2, %s56
    %s58 = sadd.s32 0, 1
    %s59 = sld [smem:[#allocation4 + %s58]]
    %s60 = smul.u32 2, %s59
    %s61 = sld [smem:[#allocation4]]
    %p62 = scmp.eq.s32.totalorder 0, 0
    // Predicated region
    $region18: #{packed_cross_entropy_loss.1} parent=1 // pred_check
      %p63 = pneg %p62
    $region19: #{packed_cross_entropy_loss.1} parent=1 // pred_check_branch
      %65 = sbr.rel (%p63) target = $region21
    $region20: #{packed_cross_entropy_loss.1} parent=1 // pred_region
      %vm66 = vcmask 0
      %67 = vst.msk [vmem:[#allocation2] sm:$0x1] %vm66, 0.0
    $region21: #{packed_cross_entropy_loss.1} parent=1 // pred_fallthru
      _
    %p68 = scmp.lt.s32.totalorder 0, %s61
    // Predicated region
    $region22: #{packed_cross_entropy_loss.1} parent=1 // pred_check
      %p69 = pneg %p68
    $region23: #{packed_cross_entropy_loss.1} parent=1 // pred_check_branch
      %71 = sbr.rel (%p69) target = $region25
    $region24: #{packed_cross_entropy_loss.1} parent=1 // pred_region
      %v72 = vld [vmem:[#allocation5] sm:$0xff]
      %v73 = vld [vmem:[#allocation5 + $0x8] sm:$0xff]
      %v74 = vld [vmem:[#allocation8] sm:$0xff]
      %v75 = vld [vmem:[#allocation8 + $0x8] sm:$0xff]
      %s76 = sadd.s32 0, 1
      %s77 = sld [smem:[#allocation4 + %s76]]
      %s78 = smul.u32 %s77, 16
      %v79 = vlaneseq
      %v80 = vshrl.u32 %v79, 7
      %v81 = vadd.s32 %v80, 8
      %v82 = vstv %s78
      %v83 = vadd.s32 %v82, %v80
      %v84 = vadd.s32 %v82, %v81
      %vm85 = vcmp.lt.s32.totalorder %v83, 16
      %vm86 = vcmp.lt.s32.totalorder %v84, 16
      %vm87 = vcmp.ge.s32.totalorder %v74, 0
      %vm88 = vcmp.ge.s32.totalorder %v75, 0
      %vm89 = vmand %vm85, %vm87
      %vm90 = vmand %vm86, %vm88
      %vm91 = vcmask 261120
      %v92 = vsel %vm91, %v72, -inf
      %93 = vmax.xlane.f32.xlu0 %v92
      %v94 = vpop.xlane.xlu0 %93
      %v95 = vsel %vm91, %v73, -inf
      %96 = vmax.xlane.f32.xlu0 %v95
      %v97 = vpop.xlane.xlu0 %96
      %v98 = vsub.f32 %v72, %v94
      %v99 = vsub.f32 %v73, %v97
      %v100 = vmul.f32 %v98, 1.442695
      %v101 = vpow.pop %v100
      %v102 = vmul.f32 %v99, 1.442695
      %v103 = vpow.pop %v102
      %v104 = vsel %vm91, %v101, 0.0
      %105 = vadd.xlane.f32.xlu0 %v104
      %v106 = vpop.xlane.xlu0 %105
      %v107 = vsel %vm91, %v103, 0.0
      %108 = vadd.xlane.f32.xlu0 %v107
      %v109 = vpop.xlane.xlu0 %108
      %v110 = vlog2.pop %v106
      %v111 = vmul.f32 %v110, 0.6931472
      %v112 = vlog2.pop %v109
      %v113 = vmul.f32 %v112, 0.6931472
      %v114 = vlaneseq
      %v115 = vand.u32 %v114, 127
      %116 = vset.pattern.permute.xlu0 0
      %117 = vperm.xlu0 %116, %v74
      %v118 = vpop.permute.xlu0 %117
      %119 = vset.pattern.permute.xlu0 0
      %120 = vperm.xlu0 %119, %v75
      %v121 = vpop.permute.xlu0 %120
      %vm122 = vcmp.eq.s32.totalorder %v115, %v118
      %vm123 = vcmp.eq.s32.totalorder %v115, %v121
      %v124 = vsel %vm122, %v72, 0.0
      %v125 = vsel %vm123, %v73, 0.0
      %v126 = vsel %vm91, %v124, 0.0
      %127 = vadd.xlane.f32.xlu0 %v126
      %v128 = vpop.xlane.xlu0 %127
      %v129 = vsel %vm91, %v125, 0.0
      %130 = vadd.xlane.f32.xlu0 %v129
      %v131 = vpop.xlane.xlu0 %130
      %v132 = vadd.f32 %v111, %v94
      %v133 = vadd.f32 %v113, %v97
      %v134 = vsub.f32 %v132, %v128
      %v135 = vsub.f32 %v133, %v131
      %v136 = vsel %vm89, %v134, 0.0
      %v137 = vsel %vm90, %v135, 0.0
      %v138 = vld [vmem:[#allocation2] sm:$0x1]
      %vm139 = vcmask 7168
      %v140 = vsel %vm139, %v136, 0.0
      %v141 = vsel %vm139, %v137, 0.0
      %v142 = vadd.f32 %v140, %v141
      %v143 = vrot.slane %v142, 4
      %v144 = vadd.f32 %v142, %v143
      %v145 = vrot.slane %v144, 2
      %v146 = vadd.f32 %v144, %v145
      %v147 = vrot.slane %v146, 1
      %v148 = vadd.f32 %v146, %v147
      %v149 = vadd.f32 %v138, %v148
      %vm150 = vcmask 0
      %151 = vst.msk [vmem:[#allocation2] sm:$0x1] %vm150, %v149
    $region25: #{packed_cross_entropy_loss.1} parent=1 // pred_fallthru
      _
    // Predicated region
    $region26: #{packed_cross_entropy_loss.1} parent=1 // pred_check
      %p152 = pneg %p62
    $region27: #{packed_cross_entropy_loss.1} parent=1 // pred_check_branch
      %154 = sbr.rel (%p152) target = $region29
    $region28: #{packed_cross_entropy_loss.1} parent=1 // pred_region
      %v155 = vld [vmem:[#allocation2] sm:$0x1]
      %vm156 = vcmask 0
      %157 = vst.msk [vmem:[#allocation10] sm:$0x1] %vm156, %v155
    $region29: #{packed_cross_entropy_loss.1} parent=1 // pred_fallthru
      _
    // Predicated region
    $region30: #{packed_cross_entropy_loss.1} parent=1 // pred_check
      _
    $region31: #{packed_cross_entropy_loss.1} parent=1 // pred_check_branch
      %159 = sbr.rel (0) target = $region33
    $region32: #{packed_cross_entropy_loss.1} parent=1 // pred_region
      %s161 = ssub.s32 16, 16
      %162 = vsyncadd [#allocation7], %s161
      %s164 = sshll.u32 [#allocation10], 4
      %s165 = int_to_ptr.vmem [resolvable:$true] %s164
      %167 = dma.vmem_to_hbm [thread:$0]  %s165, 16, %s3, [#allocation7]
    $region33: #{packed_cross_entropy_loss.1} parent=1 // pred_fallthru
      _
    // Predicated region
    $region34: #{packed_cross_entropy_loss.1} parent=1 // pred_check
      _
    $region35: #{packed_cross_entropy_loss.1} parent=1 // pred_check_branch
      %169 = sbr.rel (0) target = $region37
    $region36: #{packed_cross_entropy_loss.1} parent=1 // pred_region
      %170 = dma.done [#allocation7], 16
    $region37: #{packed_cross_entropy_loss.1} parent=1 // pred_fallthru
      _
    %171 = vsyncpa [#allocation6], 1
    %172 = vsyncpa [#allocation9], 1
    %173 = vsyncpa [#allocation7], 1

</llo_original>
